<compile_context>
chip_gen: v5e
topology: v5e:2x2
jax: 0.10.0
libtpu: 0.0.40
codegen_flags: <defaults>
</compile_context>

<pallas_src>
import functools
import math

import jax
import jax.numpy as jnp
from jax.experimental import pallas as pl
from jax.experimental.pallas import tpu as pltpu


def _round_up(x, m):
    return (x + m - 1) // m * m


def _fused_mlp_kernel(num_layers, x_ref, *refs):
    """Fused pointwise-conv + folded-BN + ReLU MLP over one M tile.

    x_ref:  (tile_rows, p*Cin)      packed input tile (f32)
    refs:   w0, b0, w1, b1, ...     block-diag folded weights / tiled biases
            o_ref (last)            (tile_rows, p*C_last) packed output tile
    """
    o_ref = refs[-1]
    h = x_ref[...]
    for li in range(num_layers):           # static unroll over layers
        w = refs[2 * li][...]               # (p*Cin_l, p*Cout_l), block-diagonal
        b = refs[2 * li + 1][...]           # (1, p*Cout_l)
        h = jnp.dot(h, w, preferred_element_type=jnp.float32) + b
        h = jnp.maximum(h, 0.0)             # ReLU
    o_ref[...] = h.astype(o_ref.dtype)


def _fold_params(params, p, eps):
    """Fold eval-mode BN into the conv weight/bias and block-diagonalize by p."""
    folded = []
    for prm in params:
        inv_std = 1.0 / jnp.sqrt(prm["var"] + eps)
        scale = prm["gamma"] * inv_std                            # (Cout,)
        w = prm["w"].T * scale[None, :]                           # (Cin, Cout) folded
        b = (prm["b"] - prm["mean"]) * scale + prm["beta"]        # (Cout,)
        w_blk = jnp.kron(jnp.eye(p, dtype=w.dtype), w)            # (p*Cin, p*Cout)
        b_blk = jnp.tile(b, p)[None, :]                           # (1, p*Cout)
        folded.append((w_blk, b_blk))
    return folded


def weight_net_hidden_forward(xyz, params, eps=1e-5, max_tile_rows=1024):
    """xyz: (B, N, K, C_in) float32 -> (B, N, K, C_last) float32."""
    B, N, K, c_in = xyz.shape
    c_last = params[-1]["w"].shape[0]
    M = B * N * K

    # Row-packing factor: make p*C_last a multiple of 128 lanes (lane-dense
    # output stores), capped so block-diagonal weights stay tiny.
    p = min(8, max(1, 128 // math.gcd(128, int(c_last))))

    n_super = -(-M // p)                                   # ceil(M / p) packed rows
    tile_rows = min(max_tile_rows, _round_up(n_super, 8))  # up to 4096 original rows/step
    n_super_pad = _round_up(n_super, tile_rows)
    Mp = n_super_pad * p

    x2d = xyz.reshape(M, c_in).astype(jnp.float32)
    if Mp != M:
        x2d = jnp.pad(x2d, ((0, Mp - M), (0, 0)))
    x_super = x2d.reshape(n_super_pad, p * c_in)           # free row-major repack

    folded = _fold_params(params, p, eps)
    num_layers = len(folded)

    in_specs = [pl.BlockSpec((tile_rows, p * c_in), lambda i: (i, 0))]
    flat_params = []
    for w_blk, b_blk in folded:
        # Full-array blocks with constant index_map -> fetched once, VMEM-resident.
        in_specs.append(pl.BlockSpec(w_blk.shape, lambda i: (0, 0)))
        in_specs.append(pl.BlockSpec(b_blk.shape, lambda i: (0, 0)))
        flat_params.extend([w_blk, b_blk])

    out_super = pl.pallas_call(
        functools.partial(_fused_mlp_kernel, num_layers),
        out_shape=jax.ShapeDtypeStruct((n_super_pad, p * c_last), jnp.float32),
        grid_spec=pltpu.PrefetchScalarGridSpec(
            num_scalar_prefetch=0,
            grid=(n_super_pad // tile_rows,),
            in_specs=in_specs,
            out_specs=pl.BlockSpec((tile_rows, p * c_last), lambda i: (i, 0)),
        ),
        compiler_params=pltpu.CompilerParams(
            dimension_semantics=("parallel",),
            vmem_limit_bytes=32 * 1024 * 1024,
        ),
    )(x_super, *flat_params)

    out2d = out_super.reshape(Mp, c_last)                  # free row-major repack
    if Mp != M:
        out2d = out2d[:M]
    return out2d.reshape(B, N, K, c_last)


def init_params(key, in_channel, hidden_units):
    """Deterministic synthetic parameters mirroring the PyTorch module shapes."""
    params = []
    last = in_channel
    for out_channel in hidden_units:
        k_w, k_b, k_g, k_be, k_m, k_v, key = jax.random.split(key, 7)
        # Conv2d(last, out, kernel_size=1): weight (out, last, 1, 1) -> (out, last)
        w = jax.random.normal(k_w, (out_channel, last), jnp.float32) * 0.1
        b = jax.random.normal(k_b, (out_channel,), jnp.float32) * 0.1
        # BatchNorm2d(out): gamma, beta, running_mean, running_var
        gamma = 1.0 + 0.1 * jax.random.normal(k_g, (out_channel,), jnp.float32)
        beta = 0.1 * jax.random.normal(k_be, (out_channel,), jnp.float32)
        rmean = 0.1 * jax.random.normal(k_m, (out_channel,), jnp.float32)
        rvar = jnp.abs(1.0 + 0.1 * jax.random.normal(k_v, (out_channel,), jnp.float32))
        params.append(dict(w=w, b=b, gamma=gamma, beta=beta, mean=rmean, var=rvar))
        last = out_channel
    return params


def reference_forward(xyz, params, eps=1e-5):
    """Pure-JAX reference (eval-mode BN), channels-last."""
    x = xyz
    for prm in params:
        y = jnp.einsum("bnkc,oc->bnko", x, prm["w"]) + prm["b"]
        y = (y - prm["mean"]) / jnp.sqrt(prm["var"] + eps) * prm["gamma"] + prm["beta"]
        x = jnp.maximum(y, 0.0)
    return x


if __name__ == "__main__":
    key = jax.random.PRNGKey(0)
    k_in, k_par = jax.random.split(key)

    B, N, K, C_in = 2, 16, 8, 4          # xyz: (B, N, K, C_in)
    hidden_units = [32, 32]

    xyz = jax.random.normal(k_in, (B, N, K, C_in), jnp.float32)
    params = init_params(k_par, C_in, hidden_units)

    out = weight_net_hidden_forward(xyz, params)
    out = jax.block_until_ready(out)

    ref = reference_forward(xyz, params)
    assert out.shape == (B, N, K, hidden_units[-1]), out.shape
    assert jnp.allclose(out, ref, atol=1e-4, rtol=1e-4), (
        float(jnp.max(jnp.abs(out - ref))))

    print("KERNEL_OK")
</pallas_src>

<mosaic_0001>
module attributes {stable_mosaic.version = 11 : i64} {
  func.func @_fused_mlp_kernel(%arg0: i32, %arg1: memref<64x16xf32, #tpu.memory_space<vmem>>, %arg2: memref<16x128xf32, #tpu.memory_space<vmem>>, %arg3: memref<1x128xf32, #tpu.memory_space<vmem>>, %arg4: memref<128x128xf32, #tpu.memory_space<vmem>>, %arg5: memref<1x128xf32, #tpu.memory_space<vmem>>, %arg6: memref<64x128xf32, #tpu.memory_space<vmem>>) attributes {dimension_semantics = [#tpu.dimension_semantics<parallel>], iteration_bounds = array<i64: 1>, scalar_prefetch = 0 : i64, scratch_operands = 0 : i64, tpu.core_type = #tpu.core_type<tc>, window_params = [{transform_indices = @transform_0, window_bounds = array<i64: 64, 16>}, {pipeline_mode = #tpu.pipeline_mode<synchronous>, transform_indices = @transform_1, window_bounds = array<i64: 16, 128>}, {pipeline_mode = #tpu.pipeline_mode<synchronous>, transform_indices = @transform_2, window_bounds = array<i64: 1, 128>}, {pipeline_mode = #tpu.pipeline_mode<synchronous>, transform_indices = @transform_3, window_bounds = array<i64: 128, 128>}, {pipeline_mode = #tpu.pipeline_mode<synchronous>, transform_indices = @transform_4, window_bounds = array<i64: 1, 128>}, {transform_indices = @transform_5, window_bounds = array<i64: 64, 128>}]} {
    %c0 = arith.constant 0 : index
    %c0_0 = arith.constant 0 : index
    %0 = vector.load %arg1[%c0, %c0_0] : memref<64x16xf32, #tpu.memory_space<vmem>>, vector<64x16xf32>
    %c0_1 = arith.constant 0 : index
    %c0_2 = arith.constant 0 : index
    %1 = vector.load %arg2[%c0_1, %c0_2] : memref<16x128xf32, #tpu.memory_space<vmem>>, vector<16x128xf32>
    %c0_3 = arith.constant 0 : index
    %c0_4 = arith.constant 0 : index
    %2 = vector.load %arg3[%c0_3, %c0_4] : memref<1x128xf32, #tpu.memory_space<vmem>>, vector<1x128xf32>
    %cst = arith.constant dense<0.000000e+00> : vector<64x128xf32>
    %3 = tpu.matmul %0, %1, %cst {dimension_numbers = #tpu.dot_dimension_numbers<[1], [0], [0], [1], [0, 0, 1, 1], [], []>} : vector<64x16xf32>, vector<16x128xf32>, vector<64x128xf32> -> vector<64x128xf32>
    %4 = vector.broadcast %2 : vector<1x128xf32> to vector<64x128xf32>
    %5 = arith.addf %3, %4 : vector<64x128xf32>
    %cst_5 = arith.constant 0.000000e+00 : f32
    %6 = vector.broadcast %cst_5 : f32 to vector<64x128xf32>
    %7 = arith.maximumf %5, %6 : vector<64x128xf32>
    %c0_6 = arith.constant 0 : index
    %c0_7 = arith.constant 0 : index
    %8 = vector.load %arg4[%c0_6, %c0_7] : memref<128x128xf32, #tpu.memory_space<vmem>>, vector<128x128xf32>
    %c0_8 = arith.constant 0 : index
    %c0_9 = arith.constant 0 : index
    %9 = vector.load %arg5[%c0_8, %c0_9] : memref<1x128xf32, #tpu.memory_space<vmem>>, vector<1x128xf32>
    %cst_10 = arith.constant dense<0.000000e+00> : vector<64x128xf32>
    %10 = tpu.matmul %7, %8, %cst_10 {dimension_numbers = #tpu.dot_dimension_numbers<[1], [0], [0], [1], [0, 0, 1, 1], [], []>} : vector<64x128xf32>, vector<128x128xf32>, vector<64x128xf32> -> vector<64x128xf32>
    %11 = vector.broadcast %9 : vector<1x128xf32> to vector<64x128xf32>
    %12 = arith.addf %10, %11 : vector<64x128xf32>
    %cst_11 = arith.constant 0.000000e+00 : f32
    %13 = vector.broadcast %cst_11 : f32 to vector<64x128xf32>
    %14 = arith.maximumf %12, %13 : vector<64x128xf32>
    %c0_12 = arith.constant 0 : index
    %c0_13 = arith.constant 0 : index
    %15 = vector.load %arg6[%c0_12, %c0_13] : memref<64x128xf32, #tpu.memory_space<vmem>>, vector<64x128xf32>
    tpu.vector_store %arg6[%c0_12, %c0_13], %14 {strides = array<i32>} : memref<64x128xf32, #tpu.memory_space<vmem>>, vector<64x128xf32>,
    return
  }
  func.func @transform_0(%arg0: i32) -> (i32, i32) {
    %c0_i32 = arith.constant 0 : i32
    %c0_i32_0 = arith.constant 0 : i32
    return %arg0, %c0_i32 : i32, i32
  }
  func.func @transform_1(%arg0: i32) -> (i32, i32) {
    %c0_i32 = arith.constant 0 : i32
    %c0_i32_0 = arith.constant 0 : i32
    %c0_i32_1 = arith.constant 0 : i32
    return %c0_i32, %c0_i32_0 : i32, i32
  }
  func.func @transform_2(%arg0: i32) -> (i32, i32) {
    %c0_i32 = arith.constant 0 : i32
    %c0_i32_0 = arith.constant 0 : i32
    %c0_i32_1 = arith.constant 0 : i32
    return %c0_i32, %c0_i32_0 : i32, i32
  }
  func.func @transform_3(%arg0: i32) -> (i32, i32) {
    %c0_i32 = arith.constant 0 : i32
    %c0_i32_0 = arith.constant 0 : i32
    %c0_i32_1 = arith.constant 0 : i32
    return %c0_i32, %c0_i32_0 : i32, i32
  }
  func.func @transform_4(%arg0: i32) -> (i32, i32) {
    %c0_i32 = arith.constant 0 : i32
    %c0_i32_0 = arith.constant 0 : i32
    %c0_i32_1 = arith.constant 0 : i32
    return %c0_i32, %c0_i32_0 : i32, i32
  }
  func.func @transform_5(%arg0: i32) -> (i32, i32) {
    %c0_i32 = arith.constant 0 : i32
    %c0_i32_0 = arith.constant 0 : i32
    return %arg0, %c0_i32 : i32, i32
  }
}

</mosaic_0001>

<llo_original>
// kernel: tpu_custom_call.1
$region0: #{tpu_custom_call.1}
  #allocation0 [shape = 'u32[]', space=smem, size = 0x4, offset = 0x4, fixed_abs, tag = 'smem constant byte address 0x4 - core index']
  #allocation1 [shape = 'u32[72,128]{1,0:T(1,128)}', space=vmem, size = 0x9000, scoped, tag = 'internal scratch']
  %s0 = inlined_call_operand.vmem [shape: f32[64,16], index: 0, kind: input, shape index: {}]
  %s1 = inlined_call_operand.vmem [shape: f32[16,128], index: 1, kind: input, shape index: {}]
  %s2 = inlined_call_operand.vmem [shape: f32[1,128], index: 2, kind: input, shape index: {}]
  %s3 = inlined_call_operand.hbm [shape: f32[128,128], index: 3, kind: input, shape index: {}]
  %s4 = inlined_call_operand.vmem [shape: f32[1,128], index: 4, kind: input, shape index: {}]
  %s5 = inlined_call_operand.hbm [shape: f32[64,128], index: 5, kind: output, shape index: {}]
  %s6 = sld [smem:[#allocation0]]
  $region34: #{tpu_custom_call.1} parent=0
    _
  %s8 = ssub.s32 1, %s6
  %s9 = scalar_select 0, %s8, %s6
  $region1: #{tpu_custom_call.1} parent=0
    #allocation2 [shape = 'u8[65536]{0}', space=vmem, size = 0x10000, scoped, tag = 'input window, operand 3, single buffered']
    #allocation3 [shape = 's32[1]{0}', space=sflag, size = 0x4, scoped, tag = 'scoped memory for tpu_custom_call.1']
    #allocation4 [shape = 's32[1]{0}', space=sflag, size = 0x4, scoped, tag = 'scoped memory for tpu_custom_call.1']
    #allocation5 [shape = 'u8[32768]{0}', space=vmem, size = 0x8000, scoped, tag = 'output window, operand 0, single buffered']
    %10 = vsyncpa [#allocation3], 0
    %11 = vsyncpa [#allocation4], 0
    // Predicated region
    $region2: #{tpu_custom_call.1} parent=1 // pred_check
      _
    $region3: #{tpu_custom_call.1} parent=1 // pred_check_branch
      %13 = sbr.rel (0) target = $region5
    $region4: #{tpu_custom_call.1} parent=1 // pred_region
      _
    $region5: #{tpu_custom_call.1} parent=1 // pred_fallthru
      _
    // Predicated region
    $region6: #{tpu_custom_call.1} parent=1 // pred_check
      _
    $region7: #{tpu_custom_call.1} parent=1 // pred_check_branch
      %15 = sbr.rel (0) target = $region9
    $region8: #{tpu_custom_call.1} parent=1 // pred_region
      _
    $region9: #{tpu_custom_call.1} parent=1 // pred_fallthru
      _
    // Predicated region
    $region10: #{tpu_custom_call.1} parent=1 // pred_check
      _
    $region11: #{tpu_custom_call.1} parent=1 // pred_check_branch
      %17 = sbr.rel (0) target = $region13
    $region12: #{tpu_custom_call.1} parent=1 // pred_region
      _
    $region13: #{tpu_custom_call.1} parent=1 // pred_fallthru
      _
    // Predicated region
    $region14: #{tpu_custom_call.1} parent=1 // pred_check
      _
    $region15: #{tpu_custom_call.1} parent=1 // pred_check_branch
      %19 = sbr.rel (0) target = $region17
    $region16: #{tpu_custom_call.1} parent=1 // pred_region
      %21 = vsyncadd [#allocation3], 0
      %s22 = sshll.u32 %s3, 4
      %s23 = int_to_ptr.hbm [resolvable:$true] %s22
      %s24 = sshll.u32 [#allocation2], 4
      %s25 = int_to_ptr.vmem [resolvable:$true] %s24
      %30 = dma.hbm_to_vmem [thread:$0]  %s23, 2048, %s25, [#allocation3], 128, 128, 8
    $region17: #{tpu_custom_call.1} parent=1 // pred_fallthru
      _
    // Predicated region
    $region18: #{tpu_custom_call.1} parent=1 // pred_check
      _
    $region19: #{tpu_custom_call.1} parent=1 // pred_check_branch
      %32 = sbr.rel (0) target = $region21
    $region20: #{tpu_custom_call.1} parent=1 // pred_region
      _
    $region21: #{tpu_custom_call.1} parent=1 // pred_fallthru
      _
    // Predicated region
    $region22: #{tpu_custom_call.1} parent=1 // pred_check
      _
    $region23: #{tpu_custom_call.1} parent=1 // pred_check_branch
      %34 = sbr.rel (0) target = $region25
    $region24: #{tpu_custom_call.1} parent=1 // pred_region
      %36 = dma.done [#allocation3], 2048
    $region25: #{tpu_custom_call.1} parent=1 // pred_fallthru
      _
    %v37 = vld [vmem:[%s0] sm:$0xff]
    %v38 = vld [vmem:[%s0 + $0x8] sm:$0xff]
    %v39 = vld [vmem:[%s0 + $0x10] sm:$0xff]
    %v40 = vld [vmem:[%s0 + $0x18] sm:$0xff]
    %v41 = vld [vmem:[%s0 + $0x20] sm:$0xff]
    %v42 = vld [vmem:[%s0 + $0x28] sm:$0xff]
    %v43 = vld [vmem:[%s0 + $0x30] sm:$0xff]
    %v44 = vld [vmem:[%s0 + $0x38] sm:$0xff]
    %v45 = vld [vmem:[%s1] sm:$0xff]
    %v46 = vld [vmem:[%s1 + $0x8] sm:$0xff]
    %v47 = vld [vmem:[%s2] sm:$0x1]
    %v49 = vperm.slane %v47, 0
    %vm51 = vcmask 130048
    %v53 = vsel %vm51, %v37, 0
    %v56 = vsel %vm51, %v38, 0
    %v59 = vsel %vm51, %v39, 0
    %v62 = vsel %vm51, %v40, 0
    %v65 = vsel %vm51, %v41, 0
    %v68 = vsel %vm51, %v42, 0
    %v71 = vsel %vm51, %v43, 0
    %v74 = vsel %vm51, %v44, 0
    %76 = vmatpush.msra.mxu0 0.0
    %77 = vmatpush.msra.mxu0 0.0
    %78 = vmatpush.msra.mxu0 0.0
    %79 = vmatpush.msra.mxu0 0.0
    %80 = vmatpush.msra.mxu0 0.0
    %81 = vmatpush.msra.mxu0 0.0
    %82 = vmatpush.msra.mxu0 0.0
    %83 = vmatpush.msra.mxu0 0.0
    %84 = vmatpush.msra.mxu0 0.0
    %85 = vmatpush.msra.mxu0 0.0
    %86 = vmatpush.msra.mxu0 0.0
    %87 = vmatpush.msra.mxu0 0.0
    %88 = vmatpush.msra.mxu0 0.0
    %89 = vmatpush.msra.mxu0 0.0
    %90 = vmatpush.msra.mxu0 %v46
    %91 = vmatpush.msra.mxu0 %v45
    %92 = vmatmul.f32.gmra.mxu0 %v53
    %v93 = vpop.f32.mrf.mxu0
    %v94 = vadd.f32 %v49, %v93
    %95 = vmatmul.f32.gmra.mxu0 %v56
    %v96 = vpop.f32.mrf.mxu0
    %v97 = vadd.f32 %v49, %v96
    %98 = vmatmul.f32.gmra.mxu0 %v59
    %v99 = vpop.f32.mrf.mxu0
    %v100 = vadd.f32 %v49, %v99
    %101 = vmatmul.f32.gmra.mxu0 %v62
    %v102 = vpop.f32.mrf.mxu0
    %v103 = vadd.f32 %v49, %v102
    %104 = vmatmul.f32.gmra.mxu0 %v65
    %v105 = vpop.f32.mrf.mxu0
    %v106 = vadd.f32 %v49, %v105
    %107 = vmatmul.f32.gmra.mxu0 %v68
    %v108 = vpop.f32.mrf.mxu0
    %v109 = vadd.f32 %v49, %v108
    %110 = vmatmul.f32.gmra.mxu0 %v71
    %v111 = vpop.f32.mrf.mxu0
    %v112 = vadd.f32 %v49, %v111
    %113 = vmatmul.f32.gmra.mxu0 %v74
    %v114 = vpop.f32.mrf.mxu0
    %v115 = vadd.f32 %v49, %v114
    %116 = vdwg.mxu0
    %v117 = vmax.f32 %v94, 0.0
    %v118 = vmax.f32 %v97, 0.0
    %v119 = vmax.f32 %v100, 0.0
    %v120 = vmax.f32 %v103, 0.0
    %v121 = vmax.f32 %v106, 0.0
    %v122 = vmax.f32 %v109, 0.0
    %v123 = vmax.f32 %v112, 0.0
    %v124 = vmax.f32 %v115, 0.0
    %v125 = vld [vmem:[#allocation2] sm:$0xff]
    %v126 = vld [vmem:[#allocation2 + $0x8] sm:$0xff]
    %v127 = vld [vmem:[#allocation2 + $0x10] sm:$0xff]
    %v128 = vld [vmem:[#allocation2 + $0x18] sm:$0xff]
    %v129 = vld [vmem:[#allocation2 + $0x20] sm:$0xff]
    %v130 = vld [vmem:[#allocation2 + $0x28] sm:$0xff]
    %v131 = vld [vmem:[#allocation2 + $0x30] sm:$0xff]
    %v132 = vld [vmem:[#allocation2 + $0x38] sm:$0xff]
    %v133 = vld [vmem:[#allocation2 + $0x40] sm:$0xff]
    %v134 = vld [vmem:[#allocation2 + $0x48] sm:$0xff]
    %v135 = vld [vmem:[#allocation2 + $0x50] sm:$0xff]
    %v136 = vld [vmem:[#allocation2 + $0x58] sm:$0xff]
    %v137 = vld [vmem:[#allocation2 + $0x60] sm:$0xff]
    %v138 = vld [vmem:[#allocation2 + $0x68] sm:$0xff]
    %v139 = vld [vmem:[#allocation2 + $0x70] sm:$0xff]
    %v140 = vld [vmem:[#allocation2 + $0x78] sm:$0xff]
    %v141 = vld [vmem:[%s4] sm:$0x1]
    %v143 = vperm.slane %v141, 0
    %145 = vmatpush.msra.mxu0 %v140
    %146 = vmatpush.msra.mxu0 %v139
    %147 = vmatpush.msra.mxu0 %v138
    %148 = vmatpush.msra.mxu0 %v137
    %149 = vmatpush.msra.mxu0 %v136
    %150 = vmatpush.msra.mxu0 %v135
    %151 = vmatpush.msra.mxu0 %v134
    %152 = vmatpush.msra.mxu0 %v133
    %153 = vmatpush.msra.mxu0 %v132
    %154 = vmatpush.msra.mxu0 %v131
    %155 = vmatpush.msra.mxu0 %v130
    %156 = vmatpush.msra.mxu0 %v129
    %157 = vmatpush.msra.mxu0 %v128
    %158 = vmatpush.msra.mxu0 %v127
    %159 = vmatpush.msra.mxu0 %v126
    %160 = vmatpush.msra.mxu0 %v125
    %161 = vmatmul.f32.gmra.mxu0 %v117
    %v162 = vpop.f32.mrf.mxu0
    %v163 = vadd.f32 %v143, %v162
    %164 = vmatmul.f32.gmra.mxu0 %v118
    %v165 = vpop.f32.mrf.mxu0
    %v166 = vadd.f32 %v143, %v165
    %167 = vmatmul.f32.gmra.mxu0 %v119
    %v168 = vpop.f32.mrf.mxu0
    %v169 = vadd.f32 %v143, %v168
    %170 = vmatmul.f32.gmra.mxu0 %v120
    %v171 = vpop.f32.mrf.mxu0
    %v172 = vadd.f32 %v143, %v171
    %173 = vmatmul.f32.gmra.mxu0 %v121
    %v174 = vpop.f32.mrf.mxu0
    %v175 = vadd.f32 %v143, %v174
    %176 = vmatmul.f32.gmra.mxu0 %v122
    %v177 = vpop.f32.mrf.mxu0
    %v178 = vadd.f32 %v143, %v177
    %179 = vmatmul.f32.gmra.mxu0 %v123
    %v180 = vpop.f32.mrf.mxu0
    %v181 = vadd.f32 %v143, %v180
    %182 = vmatmul.f32.gmra.mxu0 %v124
    %v183 = vpop.f32.mrf.mxu0
    %v184 = vadd.f32 %v143, %v183
    %185 = vdwg.mxu0
    %v186 = vmax.f32 %v163, 0.0
    %v187 = vmax.f32 %v166, 0.0
    %v188 = vmax.f32 %v169, 0.0
    %v189 = vmax.f32 %v172, 0.0
    %v190 = vmax.f32 %v175, 0.0
    %v191 = vmax.f32 %v178, 0.0
    %v192 = vmax.f32 %v181, 0.0
    %v193 = vmax.f32 %v184, 0.0
    %194 = vst [vmem:[#allocation5] sm:$0xff] %v186
    %195 = vst [vmem:[#allocation5 + $0x8] sm:$0xff] %v187
    %196 = vst [vmem:[#allocation5 + $0x10] sm:$0xff] %v188
    %197 = vst [vmem:[#allocation5 + $0x18] sm:$0xff] %v189
    %198 = vst [vmem:[#allocation5 + $0x20] sm:$0xff] %v190
    %199 = vst [vmem:[#allocation5 + $0x28] sm:$0xff] %v191
    %200 = vst [vmem:[#allocation5 + $0x30] sm:$0xff] %v192
    %201 = vst [vmem:[#allocation5 + $0x38] sm:$0xff] %v193
    // Predicated region
    $region26: #{tpu_custom_call.1} parent=1 // pred_check
      _
    $region27: #{tpu_custom_call.1} parent=1 // pred_check_branch
      %203 = sbr.rel (0) target = $region29
    $region28: #{tpu_custom_call.1} parent=1 // pred_region
      %205 = vsyncadd [#allocation4], 0
      %s206 = sshll.u32 [#allocation5], 4
      %s207 = int_to_ptr.vmem [resolvable:$true] %s206
      %s208 = sshll.u32 %s5, 4
      %s209 = int_to_ptr.hbm [resolvable:$true] %s208
      %214 = dma.vmem_to_hbm [thread:$0]  %s207, 1024, %s209, [#allocation4], 128, 128, 8
    $region29: #{tpu_custom_call.1} parent=1 // pred_fallthru
      _
    // Predicated region
    $region30: #{tpu_custom_call.1} parent=1 // pred_check
      _
    $region31: #{tpu_custom_call.1} parent=1 // pred_check_branch
      %216 = sbr.rel (0) target = $region33
    $region32: #{tpu_custom_call.1} parent=1 // pred_region
      %218 = dma.done [#allocation4], 1024
    $region33: #{tpu_custom_call.1} parent=1 // pred_fallthru
      _
    %219 = vsyncpa [#allocation3], 1
    %220 = vsyncpa [#allocation4], 1

</llo_original>
